<compile_context>
chip_gen: v7x
topology: tpu7x:2x2x1
jax: 0.10.0
libtpu: 0.0.40
codegen_flags: <defaults>
</compile_context>

<pallas_src>
import functools
import math

import jax
import jax.numpy as jnp
from jax import lax
from jax.experimental import pallas as pl
from jax.experimental.pallas import tpu as pltpu

BN_EPS = 1e-5


def _round_up(x, m):
    return ((x + m - 1) // m) * m


# ----------------------------------------------------------------------------
# Fused Conv2d(3x3, stride 2, pad 1) + BatchNorm(eval) + ReLU  (gridded)
# ----------------------------------------------------------------------------
def _conv_bn_relu_kernel(p_ref, w_ref, scale_ref, shift_ref, o_ref):
    # p_ref:     (C_in*9, L_TILE)  im2col patch tile, lane axis = (n, h, w)
    # w_ref:     (C_out, C_in*9)   grid-resident weight (index_map -> block 0)
    # scale_ref: (C_out, 1)        gamma / sqrt(var + eps)
    # shift_ref: (C_out, 1)        (conv_bias - mean) * scale + beta
    # o_ref:     (C_out, L_TILE)   lane-dense output tile
    acc = jnp.dot(w_ref[...], p_ref[...], preferred_element_type=jnp.float32)
    acc = acc * scale_ref[...] + shift_ref[...]
    o_ref[...] = jnp.maximum(acc, 0.0).astype(o_ref.dtype)


def _pick_l_tile(k, c_out, l):
    # Budget ~8 MiB for the double-buffered input/output column tiles so one
    # constant fits v5e's 16 MiB default scope, v6e's 32 MiB and v7x's 64 MiB
    # physical VMEM.  >=512-wide lane tiles already reach ~85% of the HBM
    # roofline, so bigger tiles buy little.
    budget = 8 * 1024 * 1024
    bytes_per_lane = 4 * 2 * (k + c_out)          # f32, double-buffered in+out
    tile = max(128, min(4096, (budget // bytes_per_lane) // 128 * 128))
    return min(tile, _round_up(l, 128))


def conv_bn_relu_pallas(x_cnhw, w, scale, shift):
    """x_cnhw: (C_in, N, H, W); w: (C_out, C_in, 3, 3); scale/shift: (C_out,).

    Returns the conv+BN+ReLU output in (C_out, N, H_out, W_out) layout so the
    next layer builds its patches from it with no XLA transpose in between.
    """
    C_in, N, H, W = x_cnhw.shape
    C_out = w.shape[0]
    H_out = (H - 1) // 2 + 1   # k=3, s=2, p=1
    W_out = (W - 1) // 2 + 1
    K = C_in * 9
    L = N * H_out * W_out

    # Wrapper-side im2col (strided slices only, no transpose): taps fold into
    # the contraction dim, (n, h, w) fold into the lane axis.
    # TODO(synk): fold the 9-tap gather into the kernel to avoid writing the
    #             patch slab to HBM (remaining ~2.25x input-read inflation).
    x_pad = jnp.pad(x_cnhw, ((0, 0), (0, 0), (1, 1), (1, 1)))
    taps = []
    for ky in range(3):
        for kx in range(3):
            taps.append(
                x_pad[:, :, ky:ky + 2 * H_out - 1:2, kx:kx + 2 * W_out - 1:2])
    patches = jnp.stack(taps, axis=1).reshape(K, L)   # (C_in*9, N*Ho*Wo)

    L_TILE = _pick_l_tile(K, C_out, L)
    L_pad = _round_up(L, L_TILE)
    patches = jnp.pad(patches, ((0, 0), (0, L_pad - L)))   # lane-dense slab

    w2 = w.reshape(C_out, K)
    scale2 = scale.reshape(C_out, 1)
    shift2 = shift.reshape(C_out, 1)

    flops = 2 * C_out * K * L_pad
    bytes_accessed = 4 * (K * L_pad + C_out * K + 2 * C_out + C_out * L_pad)

    out = pl.pallas_call(
        _conv_bn_relu_kernel,
        out_shape=jax.ShapeDtypeStruct((C_out, L_pad), jnp.float32),
        grid_spec=pltpu.PrefetchScalarGridSpec(
            num_scalar_prefetch=0,
            grid=(L_pad // L_TILE,),
            in_specs=[
                pl.BlockSpec((K, L_TILE), lambda i: (0, i)),
                pl.BlockSpec((C_out, K), lambda i: (0, 0)),      # resident
                pl.BlockSpec((C_out, 1), lambda i: (0, 0)),      # resident
                pl.BlockSpec((C_out, 1), lambda i: (0, 0)),      # resident
            ],
            out_specs=pl.BlockSpec((C_out, L_TILE), lambda i: (0, i)),
        ),
        compiler_params=pltpu.CompilerParams(
            dimension_semantics=("parallel",),   # megacore sharding on v7x
            vmem_limit_bytes=32 * 1024 * 1024,
        ),
        cost_estimate=pl.CostEstimate(
            flops=flops, transcendentals=0, bytes_accessed=bytes_accessed),
    )(patches, w2, scale2, shift2)

    return out[:, :L].reshape(C_out, N, H_out, W_out)


# ----------------------------------------------------------------------------
# Fused GRU (final hidden state) + fc1/relu + fc2/relu + fc3/tanh
# ----------------------------------------------------------------------------
def _gru_fc_kernel(x_ref, wih_ref, whh_ref, bih_ref, bhh_ref,
                   w1_ref, b1_ref, w2_ref, b2_ref, w3_ref, b3_ref,
                   o_ref, *, seq_len, batch_pad, hidden, fuse_gates):
    T, Nb, H = seq_len, batch_pad, hidden

    def sigmoid(v):
        return pl.reciprocal(1.0 + jnp.exp(-v))

    x_all = x_ref[...]                                # (T*Nb, I), row = t*Nb+n
    h = jnp.zeros((Nb, H), jnp.float32)

    # TODO(synk): switch the static unroll to lax.fori_loop with a VMEM gx
    #             scratch if T grows past ~8 (bounds vreg live ranges).
    if fuse_gates:
        # H % 128 == 0: one (T*Nb, I)@(I, 3H) input projection and a single
        # (Nb, H)@(H, 3H) recurrent matmul per step; [r|z|n] lane slices are
        # free lane-aligned views.
        gi = jnp.dot(x_all, wih_ref[...],
                     preferred_element_type=jnp.float32) + bih_ref[...]
        for t in range(T):                            # tiny static trip count
            gi_t = gi[t * Nb:(t + 1) * Nb]
            gh = jnp.dot(h, whh_ref[...],
                         preferred_element_type=jnp.float32) + bhh_ref[...]
            r = sigmoid(gi_t[:, :H] + gh[:, :H])
            z = sigmoid(gi_t[:, H:2 * H] + gh[:, H:2 * H])
            n = jnp.tanh(gi_t[:, 2 * H:] + r * gh[:, 2 * H:])
            h = (1.0 - z) * n + z * h
    else:
        # H not lane-aligned: keep gates pre-split (no in-loop lane slicing of
        # a fused 3H axis).  Batched input projection per gate, all timesteps.
        gx_r = jnp.dot(x_all, wih_ref[0], preferred_element_type=jnp.float32) + bih_ref[0]
        gx_z = jnp.dot(x_all, wih_ref[1], preferred_element_type=jnp.float32) + bih_ref[1]
        gx_n = jnp.dot(x_all, wih_ref[2], preferred_element_type=jnp.float32) + bih_ref[2]
        for t in range(T):
            rows = slice(t * Nb, (t + 1) * Nb)        # Nb % 8 == 0: tile aligned
            gh_r = jnp.dot(h, whh_ref[0], preferred_element_type=jnp.float32) + bhh_ref[0]
            gh_z = jnp.dot(h, whh_ref[1], preferred_element_type=jnp.float32) + bhh_ref[1]
            gh_n = jnp.dot(h, whh_ref[2], preferred_element_type=jnp.float32) + bhh_ref[2]
            r = sigmoid(gx_r[rows] + gh_r)
            z = sigmoid(gx_z[rows] + gh_z)
            n = jnp.tanh(gx_n[rows] + r * gh_n)
            h = (1.0 - z) * n + z * h

    y = jnp.maximum(jnp.dot(h, w1_ref[...], preferred_element_type=jnp.float32) + b1_ref[...], 0.0)
    y = jnp.maximum(jnp.dot(y, w2_ref[...], preferred_element_type=jnp.float32) + b2_ref[...], 0.0)
    y = jnp.tanh(jnp.dot(y, w3_ref[...], preferred_element_type=jnp.float32) + b3_ref[...])
    o_ref[...] = y.astype(o_ref.dtype)


def gru_fc_pallas(x_tnc, gru_params, fc_params):
    """x_tnc: (T, N, I) time-major GRU input. Returns the (N, E) embedding."""
    T, N, I = x_tnc.shape
    w_ih, w_hh, b_ih, b_hh = gru_params               # (3H,I) (3H,H) (3H,) (3H,)
    H = w_hh.shape[1]
    w1, b1, w2, b2, w3, b3 = fc_params
    E = w1.shape[0]

    # Pad the batch to a sublane multiple so every per-timestep row slice in
    # the kernel is (8,128)-tile aligned; padded rows are dropped at the end.
    N_pad = _round_up(N, 8)
    x_flat = jnp.pad(x_tnc, ((0, 0), (0, N_pad - N), (0, 0))).reshape(T * N_pad, I)

    fuse_gates = (H % 128 == 0)
    if fuse_gates:
        wih = w_ih.T                                  # (I, 3H), cols = [r|z|n]
        whh = w_hh.T                                  # (H, 3H)
        bih = b_ih.reshape(1, 3 * H)
        bhh = b_hh.reshape(1, 3 * H)
    else:
        wih = w_ih.reshape(3, H, I).transpose(0, 2, 1)    # (3, I, H)
        whh = w_hh.reshape(3, H, H).transpose(0, 2, 1)    # (3, H, H)
        bih = b_ih.reshape(3, 1, H)
        bhh = b_hh.reshape(3, 1, H)

    flops = (2 * T * N_pad * I * 3 * H + 2 * T * N_pad * H * 3 * H
             + 2 * N_pad * (H * E + E * E + E * E))
    transcendentals = T * N_pad * 3 * H + N_pad * E
    bytes_accessed = 4 * (x_flat.size + wih.size + whh.size + bih.size
                          + bhh.size + w1.size + b1.size + w2.size + b2.size
                          + w3.size + b3.size + N_pad * E)

    out = pl.pallas_call(
        functools.partial(_gru_fc_kernel, seq_len=T, batch_pad=N_pad,
                          hidden=H, fuse_gates=fuse_gates),
        out_shape=jax.ShapeDtypeStruct((N_pad, E), jnp.float32),
        in_specs=[pl.BlockSpec(memory_space=pltpu.MemorySpace.VMEM)] * 11,
        out_specs=pl.BlockSpec(memory_space=pltpu.MemorySpace.VMEM),
        cost_estimate=pl.CostEstimate(
            flops=flops, transcendentals=transcendentals,
            bytes_accessed=bytes_accessed),
    )(x_flat, wih, whh, bih, bhh,
      w1.T, b1.reshape(1, E), w2.T, b2.reshape(1, E), w3.T, b3.reshape(1, E))
    return out[:N]


# ----------------------------------------------------------------------------
# Full forward pass (Pallas path)
# ----------------------------------------------------------------------------
def reference_encoder_pallas(inputs, params, n_mel_channels):
    N = inputs.shape[0]
    out = inputs.reshape(N, 1, -1, n_mel_channels)    # (N, 1, H, W)
    out = out.transpose(1, 0, 2, 3)                   # (C=1, N, H, W): free move
    for (w, b, gamma, beta, mean, var) in params["convs"]:
        scale = gamma / jnp.sqrt(var + BN_EPS)
        shift = (b - mean) * scale + beta             # fold conv bias + BN
        out = conv_bn_relu_pallas(out, w, scale, shift)   # (C', N, H', W')
    C, Nb, T, M = out.shape
    # Single small transpose at the GRU boundary (mirrors .transpose(1, 2)):
    x_tnc = out.transpose(2, 1, 0, 3).reshape(T, Nb, C * M)  # feature = (c, m)
    return gru_fc_pallas(x_tnc, params["gru"], params["fc"])


# ----------------------------------------------------------------------------
# Plain-JAX reference (mirrors the PyTorch forward) + parameter init
# ----------------------------------------------------------------------------
def reference_forward(inputs, params, n_mel_channels):
    prec = lax.Precision.HIGHEST
    N = inputs.shape[0]
    out = inputs.reshape(N, 1, -1, n_mel_channels)
    for (w, b, gamma, beta, mean, var) in params["convs"]:
        out = lax.conv_general_dilated(
            out, w, window_strides=(2, 2), padding=((1, 1), (1, 1)),
            dimension_numbers=("NCHW", "OIHW", "NCHW"), precision=prec)
        out = out + b[None, :, None, None]
        out = ((out - mean[None, :, None, None])
               / jnp.sqrt(var[None, :, None, None] + BN_EPS)
               * gamma[None, :, None, None] + beta[None, :, None, None])
        out = jnp.maximum(out, 0.0)
    out = out.transpose(0, 2, 1, 3)
    T = out.shape[1]
    out = out.reshape(N, T, -1)

    w_ih, w_hh, b_ih, b_hh = params["gru"]
    H = w_hh.shape[1]
    h = jnp.zeros((N, H), jnp.float32)
    for t in range(T):
        gi = jnp.dot(out[:, t, :], w_ih.T, precision=prec) + b_ih
        gh = jnp.dot(h, w_hh.T, precision=prec) + b_hh
        r = jax.nn.sigmoid(gi[:, :H] + gh[:, :H])
        z = jax.nn.sigmoid(gi[:, H:2 * H] + gh[:, H:2 * H])
        n = jnp.tanh(gi[:, 2 * H:] + r * gh[:, 2 * H:])
        h = (1.0 - z) * n + z * h

    w1, b1, w2, b2, w3, b3 = params["fc"]
    y = jnp.maximum(jnp.dot(h, w1.T, precision=prec) + b1, 0.0)
    y = jnp.maximum(jnp.dot(y, w2.T, precision=prec) + b2, 0.0)
    y = jnp.tanh(jnp.dot(y, w3.T, precision=prec) + b3)
    return y


def calculate_channels(L, kernel_size, stride, pad, n_convs):
    for _ in range(n_convs):
        L = (L - kernel_size + 2 * pad) // stride + 1
    return L


def init_params(key, n_mel_channels, ref_enc_filters, e_dim):
    ki = iter(jax.random.split(key, 32))

    convs = []
    in_ch = 1
    for out_ch in ref_enc_filters:
        lim = 1.0 / math.sqrt(in_ch * 9)
        w = jax.random.uniform(next(ki), (out_ch, in_ch, 3, 3),
                               minval=-lim, maxval=lim, dtype=jnp.float32)
        b = jax.random.uniform(next(ki), (out_ch,),
                               minval=-lim, maxval=lim, dtype=jnp.float32)
        gamma = 1.0 + 0.1 * jax.random.normal(next(ki), (out_ch,), dtype=jnp.float32)
        beta = 0.1 * jax.random.normal(next(ki), (out_ch,), dtype=jnp.float32)
        mean = 0.1 * jax.random.normal(next(ki), (out_ch,), dtype=jnp.float32)
        var = 1.0 + 0.1 * jax.random.uniform(next(ki), (out_ch,), dtype=jnp.float32)
        convs.append((w, b, gamma, beta, mean, var))
        in_ch = out_ch

    mel_out = calculate_channels(n_mel_channels, 3, 2, 1, len(ref_enc_filters))
    gru_in = ref_enc_filters[-1] * mel_out
    H = e_dim // 2
    lim = 1.0 / math.sqrt(H)
    w_ih = jax.random.uniform(next(ki), (3 * H, gru_in), minval=-lim, maxval=lim, dtype=jnp.float32)
    w_hh = jax.random.uniform(next(ki), (3 * H, H), minval=-lim, maxval=lim, dtype=jnp.float32)
    b_ih = jax.random.uniform(next(ki), (3 * H,), minval=-lim, maxval=lim, dtype=jnp.float32)
    b_hh = jax.random.uniform(next(ki), (3 * H,), minval=-lim, maxval=lim, dtype=jnp.float32)

    def linear(k1, k2, out_f, in_f):
        l = 1.0 / math.sqrt(in_f)
        return (jax.random.uniform(k1, (out_f, in_f), minval=-l, maxval=l, dtype=jnp.float32),
                jax.random.uniform(k2, (out_f,), minval=-l, maxval=l, dtype=jnp.float32))

    w1, b1 = linear(next(ki), next(ki), e_dim, H)
    w2, b2 = linear(next(ki), next(ki), e_dim, e_dim)
    w3, b3 = linear(next(ki), next(ki), e_dim, e_dim)

    return {"convs": convs,
            "gru": (w_ih, w_hh, b_ih, b_hh),
            "fc": (w1, b1, w2, b2, w3, b3)}


if __name__ == "__main__":
    # Small ReferenceEncoder: n_mel_channels=16, ref_enc_filters=[4, 8],
    # feature_embedding_dim=32, input mels (N=2, Ty=16, n_mels=16).
    N, TY, N_MELS = 2, 16, 16
    REF_ENC_FILTERS = [4, 8]
    E_DIM = 32

    key = jax.random.PRNGKey(0)
    k_in, k_par = jax.random.split(key)
    inputs = jax.random.normal(k_in, (N, TY, N_MELS), dtype=jnp.float32)
    params = init_params(k_par, N_MELS, REF_ENC_FILTERS, E_DIM)

    out = reference_encoder_pallas(inputs, params, N_MELS)
    out = jax.block_until_ready(out)
    assert out.shape == (N, E_DIM)

    # Silent correctness check against a plain-JAX reference of the module.
    ref = reference_forward(inputs, params, N_MELS)
    assert jnp.allclose(out, ref, atol=1e-4, rtol=1e-4), float(
        jnp.max(jnp.abs(out - ref)))

    print("KERNEL_OK")
</pallas_src>

<mosaic_0001>
module attributes {stable_mosaic.version = 11 : i64} {
  func.func @_conv_bn_relu_kernel(%arg0: i32, %arg1: memref<9x128xf32, #tpu.memory_space<vmem>>, %arg2: memref<4x9xf32, #tpu.memory_space<vmem>>, %arg3: memref<4x1xf32, #tpu.memory_space<vmem>>, %arg4: memref<4x1xf32, #tpu.memory_space<vmem>>, %arg5: memref<4x128xf32, #tpu.memory_space<vmem>>) attributes {dimension_semantics = [#tpu.dimension_semantics<parallel>], iteration_bounds = array<i64: 1>, scalar_prefetch = 0 : i64, scratch_operands = 0 : i64, tpu.core_type = #tpu.core_type<tc>, window_params = [{transform_indices = @transform_0, window_bounds = array<i64: 9, 128>}, {pipeline_mode = #tpu.pipeline_mode<synchronous>, transform_indices = @transform_1, window_bounds = array<i64: 4, 9>}, {pipeline_mode = #tpu.pipeline_mode<synchronous>, transform_indices = @transform_2, window_bounds = array<i64: 4, 1>}, {pipeline_mode = #tpu.pipeline_mode<synchronous>, transform_indices = @transform_3, window_bounds = array<i64: 4, 1>}, {transform_indices = @transform_4, window_bounds = array<i64: 4, 128>}]} {
    %c0 = arith.constant 0 : index
    %c0_0 = arith.constant 0 : index
    %0 = vector.load %arg2[%c0, %c0_0] : memref<4x9xf32, #tpu.memory_space<vmem>>, vector<4x9xf32>
    %c0_1 = arith.constant 0 : index
    %c0_2 = arith.constant 0 : index
    %1 = vector.load %arg1[%c0_1, %c0_2] : memref<9x128xf32, #tpu.memory_space<vmem>>, vector<9x128xf32>
    %cst = arith.constant dense<0.000000e+00> : vector<4x128xf32>
    %2 = tpu.matmul %0, %1, %cst {dimension_numbers = #tpu.dot_dimension_numbers<[1], [0], [0], [1], [0, 0, 1, 1], [], []>} : vector<4x9xf32>, vector<9x128xf32>, vector<4x128xf32> -> vector<4x128xf32>
    %c0_3 = arith.constant 0 : index
    %c0_4 = arith.constant 0 : index
    %3 = vector.load %arg3[%c0_3, %c0_4] : memref<4x1xf32, #tpu.memory_space<vmem>>, vector<4x1xf32>
    %4 = vector.broadcast %3 : vector<4x1xf32> to vector<4x128xf32>
    %5 = arith.mulf %2, %4 : vector<4x128xf32>
    %c0_5 = arith.constant 0 : index
    %c0_6 = arith.constant 0 : index
    %6 = vector.load %arg4[%c0_5, %c0_6] : memref<4x1xf32, #tpu.memory_space<vmem>>, vector<4x1xf32>
    %7 = vector.broadcast %6 : vector<4x1xf32> to vector<4x128xf32>
    %8 = arith.addf %5, %7 : vector<4x128xf32>
    %cst_7 = arith.constant 0.000000e+00 : f32
    %9 = vector.broadcast %cst_7 : f32 to vector<4x128xf32>
    %10 = arith.maximumf %8, %9 : vector<4x128xf32>
    %c0_8 = arith.constant 0 : index
    %c0_9 = arith.constant 0 : index
    %11 = vector.load %arg5[%c0_8, %c0_9] : memref<4x128xf32, #tpu.memory_space<vmem>>, vector<4x128xf32>
    tpu.vector_store %arg5[%c0_8, %c0_9], %10 {strides = array<i32>} : memref<4x128xf32, #tpu.memory_space<vmem>>, vector<4x128xf32>,
    return
  }
  func.func @transform_0(%arg0: i32) -> (i32, i32) {
    %c0_i32 = arith.constant 0 : i32
    %c0_i32_0 = arith.constant 0 : i32
    return %c0_i32, %arg0 : i32, i32
  }
  func.func @transform_1(%arg0: i32) -> (i32, i32) {
    %c0_i32 = arith.constant 0 : i32
    %c0_i32_0 = arith.constant 0 : i32
    %c0_i32_1 = arith.constant 0 : i32
    return %c0_i32, %c0_i32_0 : i32, i32
  }
  func.func @transform_2(%arg0: i32) -> (i32, i32) {
    %c0_i32 = arith.constant 0 : i32
    %c0_i32_0 = arith.constant 0 : i32
    %c0_i32_1 = arith.constant 0 : i32
    return %c0_i32, %c0_i32_0 : i32, i32
  }
  func.func @transform_3(%arg0: i32) -> (i32, i32) {
    %c0_i32 = arith.constant 0 : i32
    %c0_i32_0 = arith.constant 0 : i32
    %c0_i32_1 = arith.constant 0 : i32
    return %c0_i32, %c0_i32_0 : i32, i32
  }
  func.func @transform_4(%arg0: i32) -> (i32, i32) {
    %c0_i32 = arith.constant 0 : i32
    %c0_i32_0 = arith.constant 0 : i32
    return %c0_i32, %arg0 : i32, i32
  }
}

</mosaic_0001>

<llo_original>
// kernel: tpu_custom_call.1
$region0: #{tpu_custom_call.1}
  #allocation0 [shape = 'u32[]', space=smem, size = 0x4, offset = 0x4, fixed_abs, tag = 'smem constant byte address 0x4 - core index']
  #allocation1 [shape = 'u32[144,128]{1,0:T(1,128)}', space=vmem, size = 0x12000, scoped, tag = 'internal scratch']
  %s0 = inlined_call_operand.hbm [shape: f32[9,128], index: 0, kind: input, shape index: {}]
  %s1 = inlined_call_operand.vmem [shape: f32[4,9], index: 1, kind: input, shape index: {}]
  %s2 = inlined_call_operand.vmem [shape: f32[4,1], index: 2, kind: input, shape index: {}]
  %s3 = inlined_call_operand.vmem [shape: f32[4,1], index: 3, kind: input, shape index: {}]
  %s4 = inlined_call_operand.hbm [shape: f32[4,128], index: 4, kind: output, shape index: {}]
  %s5 = sld [smem:[#allocation0]]
  $region30: #{tpu_custom_call.1} parent=0
    _
  %s7 = ssub.s32 1, %s5
  %s8 = scalar_select 0, %s7, %s5
  $region1: #{tpu_custom_call.1} parent=0
    #allocation2 [shape = 'u8[8192]{0}', space=vmem, size = 0x2000, scoped, tag = 'input window, operand 0, single buffered']
    #allocation3 [shape = 's32[1]{0}', space=sflag, size = 0x4, scoped, tag = 'scoped memory for tpu_custom_call.1']
    #allocation4 [shape = 's32[1]{0}', space=sflag, size = 0x4, scoped, tag = 'scoped memory for tpu_custom_call.1']
    #allocation5 [shape = 'u8[2048]{0}', space=vmem, size = 0x800, scoped, tag = 'output window, operand 0, single buffered']
    %9 = vsyncpa [#allocation3], 0
    %10 = vsyncpa [#allocation4], 0
    // Predicated region
    $region2: #{tpu_custom_call.1} parent=1 // pred_check
      _
    $region3: #{tpu_custom_call.1} parent=1 // pred_check_branch
      %12 = sbr.rel (0) target = $region5
    $region4: #{tpu_custom_call.1} parent=1 // pred_region
      %s14 = ssub.s32 256, 256
      %15 = vsyncadd [#allocation3], %s14
      %s16 = sshll.u32 [#allocation2], 4
      %s17 = int_to_ptr.vmem [resolvable:$true] %s16
      %22 = dma.hbm_to_vmem [thread:$0]  %s0, 256, %s17, [#allocation3], 128, 128, 8
    $region5: #{tpu_custom_call.1} parent=1 // pred_fallthru
      _
    // Predicated region
    $region6: #{tpu_custom_call.1} parent=1 // pred_check
      _
    $region7: #{tpu_custom_call.1} parent=1 // pred_check_branch
      %24 = sbr.rel (0) target = $region9
    $region8: #{tpu_custom_call.1} parent=1 // pred_region
      _
    $region9: #{tpu_custom_call.1} parent=1 // pred_fallthru
      _
    // Predicated region
    $region10: #{tpu_custom_call.1} parent=1 // pred_check
      _
    $region11: #{tpu_custom_call.1} parent=1 // pred_check_branch
      %26 = sbr.rel (0) target = $region13
    $region12: #{tpu_custom_call.1} parent=1 // pred_region
      _
    $region13: #{tpu_custom_call.1} parent=1 // pred_fallthru
      _
    // Predicated region
    $region14: #{tpu_custom_call.1} parent=1 // pred_check
      _
    $region15: #{tpu_custom_call.1} parent=1 // pred_check_branch
      %28 = sbr.rel (0) target = $region17
    $region16: #{tpu_custom_call.1} parent=1 // pred_region
      _
    $region17: #{tpu_custom_call.1} parent=1 // pred_fallthru
      _
    // Predicated region
    $region18: #{tpu_custom_call.1} parent=1 // pred_check
      _
    $region19: #{tpu_custom_call.1} parent=1 // pred_check_branch
      %30 = sbr.rel (0) target = $region21
    $region20: #{tpu_custom_call.1} parent=1 // pred_region
      %31 = dma.done [#allocation3], 256
    $region21: #{tpu_custom_call.1} parent=1 // pred_fallthru
      _
    %v32 = vld [vmem:[%s1] sm:$0xf]
    %v33 = vld [vmem:[#allocation2] sm:$0xff]
    %v34 = vld [vmem:[#allocation2 + $0x8] sm:$0x1]
    %vm35 = vcmask 72704
    %v37 = vsel %vm35, %v32, 0
    %vm39 = vcmask 1040384
    %v41 = vsel %vm39, %v34, 0
    %43 = vmatprep.subr.mxu0 0.0
    %44 = vmatpush1.msra.mxu0 %v33
    %45 = vmatprep.subr.mxu0 0.0
    %46 = vmatpush1.msra.mxu0 %v41
    %47 = vmatprep.subr.mxu0 0.0
    %48 = vmatpush1.msra.mxu0 0.0
    %49 = vmatprep.subr.mxu0 0.0
    %50 = vmatpush1.msra.mxu0 0.0
    %51 = vmatprep.subr.mxu0 0.0
    %52 = vmatpush1.msra.mxu0 0.0
    %53 = vmatprep.subr.mxu0 0.0
    %54 = vmatpush1.msra.mxu0 0.0
    %55 = vmatprep.subr.mxu0 0.0
    %56 = vmatpush1.msra.mxu0 0.0
    %57 = vmatprep.subr.mxu0 0.0
    %58 = vmatpush1.msra.mxu0 0.0
    %59 = vmatprep.subr.mxu0 0.0
    %60 = vmatpush1.msra.mxu0 0.0
    %61 = vmatprep.subr.mxu0 0.0
    %62 = vmatpush1.msra.mxu0 0.0
    %63 = vmatprep.subr.mxu0 0.0
    %64 = vmatpush1.msra.mxu0 0.0
    %65 = vmatprep.subr.mxu0 0.0
    %66 = vmatpush1.msra.mxu0 0.0
    %67 = vmatprep.subr.mxu0 0.0
    %68 = vmatpush1.msra.mxu0 0.0
    %69 = vmatprep.subr.mxu0 0.0
    %70 = vmatpush1.msra.mxu0 0.0
    %71 = vmatprep.subr.mxu0 0.0
    %72 = vmatpush1.msra.mxu0 0.0
    %73 = vmatprep.subr.mxu0 0.0
    %74 = vmatpush1.msra.mxu0 0.0
    %75 = vmatprep.subr.mxu0 0.0
    %76 = vmatpush1.msra.mxu0 0.0
    %77 = vmatprep.subr.mxu0 0.0
    %78 = vmatpush1.msra.mxu0 0.0
    %79 = vmatprep.subr.mxu0 0.0
    %80 = vmatpush1.msra.mxu0 0.0
    %81 = vmatprep.subr.mxu0 0.0
    %82 = vmatpush1.msra.mxu0 0.0
    %83 = vmatprep.subr.mxu0 0.0
    %84 = vmatpush1.msra.mxu0 0.0
    %85 = vmatprep.subr.mxu0 0.0
    %86 = vmatpush1.msra.mxu0 0.0
    %87 = vmatprep.subr.mxu0 0.0
    %88 = vmatpush1.msra.mxu0 0.0
    %89 = vmatprep.subr.mxu0 0.0
    %90 = vmatpush1.msra.mxu0 0.0
    %91 = vmatprep.subr.mxu0 0.0
    %92 = vmatpush1.msra.mxu0 0.0
    %93 = vmatprep.subr.mxu0 0.0
    %94 = vmatpush1.msra.mxu0 0.0
    %95 = vmatprep.subr.mxu0 0.0
    %96 = vmatpush1.msra.mxu0 0.0
    %97 = vmatprep.subr.mxu0 0.0
    %98 = vmatpush1.msra.mxu0 0.0
    %99 = vmatprep.subr.mxu0 0.0
    %100 = vmatpush1.msra.mxu0 0.0
    %101 = vmatprep.subr.mxu0 0.0
    %102 = vmatpush1.msra.mxu0 0.0
    %103 = vmatprep.subr.mxu0 0.0
    %104 = vmatpush1.msra.mxu0 0.0
    %105 = vmatprep.subr.mxu0 0.0
    %106 = vmatpush1.msra.mxu0 0.0
    %107 = vmatprep.mubr.f32.mxu0 0.0
    %108 = vmatmul.mubr.f32.gmra.mrb[0].mxu0 %v37
    %v109 = vpop.f32.mrb[0].mxu0
    %v110 = vadd.f32 0.0, %v109
    %v111 = vpop.f32.mrb[0].mxu0
    %112 = vdwg.mxu0
    %v113 = vld [vmem:[%s2] sm:$0xf]
    %115 = vset.pattern.permute.xlu0 0
    %116 = vperm.xlu0 %115, %v113
    %v117 = vpop.permute.xlu0 %116
    %v119 = vmul.f32 %v110, %v117
    %v120 = vld [vmem:[%s3] sm:$0xf]
    %122 = vset.pattern.permute.xlu0 0
    %123 = vperm.xlu0 %122, %v120
    %v124 = vpop.permute.xlu0 %123
    %v126 = vadd.f32 %v119, %v124
    %v127 = vmax.f32 %v126, 0.0
    %128 = vst [vmem:[#allocation5] sm:$0xf] %v127
    // Predicated region
    $region22: #{tpu_custom_call.1} parent=1 // pred_check
      _
    $region23: #{tpu_custom_call.1} parent=1 // pred_check_branch
      %130 = sbr.rel (0) target = $region25
    $region24: #{tpu_custom_call.1} parent=1 // pred_region
      %s132 = ssub.s32 64, 64
      %133 = vsyncadd [#allocation4], %s132
      %s135 = sshll.u32 [#allocation5], 4
      %s136 = int_to_ptr.vmem [resolvable:$true] %s135
      %138 = dma.vmem_to_hbm [thread:$0]  %s136, 64, %s4, [#allocation4]
    $region25: #{tpu_custom_call.1} parent=1 // pred_fallthru
      _
    // Predicated region
    $region26: #{tpu_custom_call.1} parent=1 // pred_check
      _
    $region27: #{tpu_custom_call.1} parent=1 // pred_check_branch
      %140 = sbr.rel (0) target = $region29
    $region28: #{tpu_custom_call.1} parent=1 // pred_region
      %141 = dma.done [#allocation4], 64
    $region29: #{tpu_custom_call.1} parent=1 // pred_fallthru
      _
    %142 = vsyncpa [#allocation3], 1
    %143 = vsyncpa [#allocation4], 1

</llo_original>
